<compile_context>
chip_gen: v7x
topology: tpu7x:2x2x1
jax: 0.10.0
libtpu: 0.0.40
codegen_flags: <defaults>
</compile_context>

<pallas_src>
import functools

import jax
import jax.numpy as jnp
from jax.experimental import pallas as pl
from jax.experimental.pallas import tpu as pltpu

_LANE = 128          # lane width (last dim)
_SUBLANE_BF16 = 16   # bf16 packed sublane tile height


def _round_up(n, m):
    return ((n + m - 1) // m) * m


def _mlp_fused_kernel(num_layers, x_ref, *refs):
    """Fused MLP: chained sigmoid(h @ W + b); intermediates stay on-chip.

    refs = (w_0, b_0, w_1, b_1, ..., w_{L-1}, b_{L-1}, out_ref)
    Shapes (already lane/sublane padded):
      x:   (BPad, KPad_0)            f32
      w_i: (KPad_i, NPad_i)          bf16   (zero-padded rows/cols)
      b_i: (1, NPad_i)               f32
      out: (BPad, NPad_{L-1})        f32
    """
    o_ref = refs[-1]
    wb_refs = refs[:-1]
    h = x_ref[...]                                    # f32 activations
    for i in range(num_layers):
        w = wb_refs[2 * i][...]                       # bf16 weights
        b = wb_refs[2 * i + 1][...]                   # f32 bias (1, NPad)
        # bf16 x bf16 on the MXU with f32 accumulation.
        acc = jnp.dot(h.astype(jnp.bfloat16), w,
                      preferred_element_type=jnp.float32)
        acc = acc + b                                 # VPU, f32
        h = jax.nn.sigmoid(acc)                       # EUP, f32 (v5e-safe)
    o_ref[...] = h.astype(o_ref.dtype)


def _build_forward(num_layers, in_features, in_padded, out_padded, out_features):
    """Returns a jitted forward(x, padded_params) -> (B, out_features)."""
    kernel = functools.partial(_mlp_fused_kernel, num_layers)
    vmem_spec = pl.BlockSpec(memory_space=pltpu.MemorySpace.VMEM)

    def forward(x, padded_params):
        B = x.shape[0]
        b_pad = _round_up(max(B, 1), _SUBLANE_BF16)
        # Zero-pad K (784 -> 896) and the batch (-> multiple of 16) so every
        # MXU operand is an unmasked, fully tiled block.
        x_pad = jnp.zeros((b_pad, in_padded), jnp.float32)
        x_pad = x_pad.at[:B, :in_features].set(x)

        flat = []
        for w, b in padded_params:
            flat.append(w)
            flat.append(b)

        y_pad = pl.pallas_call(
            kernel,
            out_shape=jax.ShapeDtypeStruct((b_pad, out_padded), jnp.float32),
            in_specs=[vmem_spec] * (1 + len(flat)),
            out_specs=vmem_spec,
        )(x_pad, *flat)
        # Slice off batch padding and lane padding (cheap host-side view op).
        return y_pad[:B, :out_features]

    return jax.jit(forward)


class MLPPallas:
    """JAX/Pallas equivalent of MLP_pytorch.forward (whole MLP fused)."""

    def __init__(self, layer_sz, key):
        assert layer_sz[0] == 784
        assert layer_sz[-1] == 10
        self.layer_sz = list(layer_sz)
        self.num_layers = len(layer_sz) - 1

        # Un-padded f32 parameters (source of truth; used by the reference).
        self.weights = []
        self.biases = []
        for i in range(self.num_layers):
            key, wk, bk = jax.random.split(key, 3)
            fan_in, fan_out = layer_sz[i], layer_sz[i + 1]
            # Xavier-normal-ish deterministic init (matches nn.init.xavier_normal_).
            std = (2.0 / (fan_in + fan_out)) ** 0.5
            w = jax.random.normal(wk, (fan_in, fan_out), jnp.float32) * std
            b = jax.random.normal(bk, (fan_out,), jnp.float32) * 0.01
            self.weights.append(w)
            self.biases.append(b)

        # Padded, bf16 weight copies for the kernel:
        #  * K (input) dim padded to a lane multiple (784 -> 896 for layer 0;
        #    later layers inherit the previous layer's padded output width).
        #  * N (output) dim padded to a lane multiple.
        # Padded rows/cols MUST stay zero so sigmoid(0)=0.5 garbage from
        # padded columns is annihilated by the next layer's zero rows.
        self.padded_params = []
        in_pad = _round_up(layer_sz[0], _LANE)
        self.in_padded = in_pad
        for i in range(self.num_layers):
            fan_in, fan_out = layer_sz[i], layer_sz[i + 1]
            out_pad = _round_up(fan_out, _LANE)
            wp = jnp.zeros((in_pad, out_pad), jnp.bfloat16)
            wp = wp.at[:fan_in, :fan_out].set(
                self.weights[i].astype(jnp.bfloat16))
            bp = jnp.zeros((1, out_pad), jnp.float32)
            bp = bp.at[0, :fan_out].set(self.biases[i])
            # Guard the cancellation invariant (see correctness note above).
            assert bool(jnp.all(wp[fan_in:, :] == 0))
            assert bool(jnp.all(wp[:, fan_out:] == 0))
            assert bool(jnp.all(bp[:, fan_out:] == 0))
            self.padded_params.append((wp, bp))
            in_pad = out_pad
        self.out_padded = in_pad

        self._forward = _build_forward(
            self.num_layers,
            self.layer_sz[0],
            self.in_padded,
            self.out_padded,
            self.layer_sz[-1],
        )

    def __call__(self, x):
        return self._forward(x, self.padded_params)


def reference_forward(x, weights, biases):
    """Pure-JAX f32 reference (PyTorch semantics)."""
    for w, b in zip(weights, biases):
        x = jax.nn.sigmoid(x @ w + b[None, :])
    return x


if __name__ == "__main__":
    key = jax.random.PRNGKey(0)
    layer_sz = [784, 32, 10]  # input 784, one hidden layer of 32, output 10

    model = MLPPallas(layer_sz, key)

    xkey = jax.random.PRNGKey(0)
    batch = 8
    x = jax.random.normal(xkey, (batch, 784), jnp.float32)

    out = jax.block_until_ready(model(x))

    ref = reference_forward(x, model.weights, model.biases)
    assert out.shape == (batch, 10)
    # bf16 MXU inputs (f32 accumulation / f32 epilogue): loosened tolerance
    # vs. the f32 reference, per review.
    assert jnp.allclose(out, ref, atol=1e-2, rtol=1e-2), (
        f"max abs err {float(jnp.max(jnp.abs(out - ref)))}")

    print("KERNEL_OK")
</pallas_src>

<mosaic_0001>
module attributes {stable_mosaic.version = 11 : i64} {
  func.func @_mlp_fused_kernel(%arg0: memref<16x896xf32, #tpu.memory_space<vmem>>, %arg1: memref<896x128xbf16, #tpu.memory_space<vmem>>, %arg2: memref<1x128xf32, #tpu.memory_space<vmem>>, %arg3: memref<128x128xbf16, #tpu.memory_space<vmem>>, %arg4: memref<1x128xf32, #tpu.memory_space<vmem>>, %arg5: memref<16x128xf32, #tpu.memory_space<vmem>>) attributes {dimension_semantics = [], scalar_prefetch = 0 : i64, scratch_operands = 0 : i64, tpu.core_type = #tpu.core_type<tc>} {
    %c0 = arith.constant 0 : index
    %c0_0 = arith.constant 0 : index
    %0 = vector.load %arg0[%c0, %c0_0] : memref<16x896xf32, #tpu.memory_space<vmem>>, vector<16x896xf32>
    %c0_1 = arith.constant 0 : index
    %c0_2 = arith.constant 0 : index
    %1 = vector.load %arg1[%c0_1, %c0_2] : memref<896x128xbf16, #tpu.memory_space<vmem>>, vector<896x128xbf16>
    %c0_3 = arith.constant 0 : index
    %c0_4 = arith.constant 0 : index
    %2 = vector.load %arg2[%c0_3, %c0_4] : memref<1x128xf32, #tpu.memory_space<vmem>>, vector<1x128xf32>
    %3 = arith.truncf %0 : vector<16x896xf32> to vector<16x896xbf16>
    %cst = arith.constant dense<0.000000e+00> : vector<16x128xf32>
    %4 = tpu.matmul %3, %1, %cst {dimension_numbers = #tpu.dot_dimension_numbers<[1], [0], [0], [1], [0, 0, 1, 1], [], []>} : vector<16x896xbf16>, vector<896x128xbf16>, vector<16x128xf32> -> vector<16x128xf32>
    %5 = vector.broadcast %2 : vector<1x128xf32> to vector<16x128xf32>
    %6 = arith.addf %4, %5 : vector<16x128xf32>
    %7 = arith.negf %6 : vector<16x128xf32>
    %8 = math.exp %7 : vector<16x128xf32>
    %cst_5 = arith.constant 1.000000e+00 : f32
    %9 = vector.broadcast %cst_5 : f32 to vector<16x128xf32>
    %10 = arith.addf %9, %8 : vector<16x128xf32>
    %11 = arith.divf %9, %10 : vector<16x128xf32>
    %c0_6 = arith.constant 0 : index
    %c0_7 = arith.constant 0 : index
    %12 = vector.load %arg3[%c0_6, %c0_7] : memref<128x128xbf16, #tpu.memory_space<vmem>>, vector<128x128xbf16>
    %c0_8 = arith.constant 0 : index
    %c0_9 = arith.constant 0 : index
    %13 = vector.load %arg4[%c0_8, %c0_9] : memref<1x128xf32, #tpu.memory_space<vmem>>, vector<1x128xf32>
    %14 = arith.truncf %11 : vector<16x128xf32> to vector<16x128xbf16>
    %cst_10 = arith.constant dense<0.000000e+00> : vector<16x128xf32>
    %15 = tpu.matmul %14, %12, %cst_10 {dimension_numbers = #tpu.dot_dimension_numbers<[1], [0], [0], [1], [0, 0, 1, 1], [], []>} : vector<16x128xbf16>, vector<128x128xbf16>, vector<16x128xf32> -> vector<16x128xf32>
    %16 = vector.broadcast %13 : vector<1x128xf32> to vector<16x128xf32>
    %17 = arith.addf %15, %16 : vector<16x128xf32>
    %18 = arith.negf %17 : vector<16x128xf32>
    %19 = math.exp %18 : vector<16x128xf32>
    %cst_11 = arith.constant 1.000000e+00 : f32
    %20 = vector.broadcast %cst_11 : f32 to vector<16x128xf32>
    %21 = arith.addf %20, %19 : vector<16x128xf32>
    %22 = arith.divf %20, %21 : vector<16x128xf32>
    %c0_12 = arith.constant 0 : index
    %c0_13 = arith.constant 0 : index
    %23 = vector.load %arg5[%c0_12, %c0_13] : memref<16x128xf32, #tpu.memory_space<vmem>>, vector<16x128xf32>
    tpu.vector_store %arg5[%c0_12, %c0_13], %22 {strides = array<i32>} : memref<16x128xf32, #tpu.memory_space<vmem>>, vector<16x128xf32>,
    return
  }
}

</mosaic_0001>

<llo_original>
// kernel: forward.1
$region0: #{forward.1}
  #allocation0 [shape = 'u32[]', space=smem, size = 0x4, offset = 0x4, fixed_abs, tag = 'smem constant byte address 0x4 - core index']
  #allocation1 [shape = 'u32[144,128]{1,0:T(1,128)}', space=vmem, size = 0x12000, scoped, tag = 'internal scratch']
  %s0 = inlined_call_operand.vmem [shape: f32[16,896], index: 0, kind: input, shape index: {}]
  %s1 = inlined_call_operand.hbm [shape: bf16[896,128], index: 1, kind: input, shape index: {}]
  %s2 = inlined_call_operand.vmem [shape: f32[1,128], index: 2, kind: input, shape index: {}]
  %s3 = inlined_call_operand.vmem [shape: bf16[128,128], index: 3, kind: input, shape index: {}]
  %s4 = inlined_call_operand.vmem [shape: f32[1,128], index: 4, kind: input, shape index: {}]
  %s5 = inlined_call_operand.vmem [shape: f32[16,128], index: 5, kind: output, shape index: {}]
  %s6 = sld [smem:[#allocation0]]
  $region34: #{forward.1} parent=0
    _
  %s8 = ssub.s32 1, %s6
  %s9 = scalar_select 0, %s8, %s6
  $region1: #{forward.1} parent=0
    #allocation2 [shape = 'u8[229376]{0}', space=vmem, size = 0x38000, scoped, tag = 'input window, operand 1, single buffered']
    #allocation3 [shape = 's32[1]{0}', space=sflag, size = 0x4, scoped, tag = 'scoped memory for forward.1']
    %10 = vsyncpa [#allocation3], 0
    // Predicated region
    $region2: #{forward.1} parent=1 // pred_check
      _
    $region3: #{forward.1} parent=1 // pred_check_branch
      %12 = sbr.rel (0) target = $region5
    $region4: #{forward.1} parent=1 // pred_region
      _
    $region5: #{forward.1} parent=1 // pred_fallthru
      _
    // Predicated region
    $region6: #{forward.1} parent=1 // pred_check
      _
    $region7: #{forward.1} parent=1 // pred_check_branch
      %14 = sbr.rel (0) target = $region9
    $region8: #{forward.1} parent=1 // pred_region
      %s16 = ssub.s32 7168, 7168
      %17 = vsyncadd [#allocation3], %s16
      %s18 = sshll.u32 [#allocation2], 4
      %s19 = int_to_ptr.vmem [resolvable:$true] %s18
      %24 = dma.hbm_to_vmem [thread:$0]  %s1, 7168, %s19, [#allocation3], 64, 64, 4
    $region9: #{forward.1} parent=1 // pred_fallthru
      _
    // Predicated region
    $region10: #{forward.1} parent=1 // pred_check
      _
    $region11: #{forward.1} parent=1 // pred_check_branch
      %26 = sbr.rel (0) target = $region13
    $region12: #{forward.1} parent=1 // pred_region
      _
    $region13: #{forward.1} parent=1 // pred_fallthru
      _
    // Predicated region
    $region14: #{forward.1} parent=1 // pred_check
      _
    $region15: #{forward.1} parent=1 // pred_check_branch
      %28 = sbr.rel (0) target = $region17
    $region16: #{forward.1} parent=1 // pred_region
      _
    $region17: #{forward.1} parent=1 // pred_fallthru
      _
    // Predicated region
    $region18: #{forward.1} parent=1 // pred_check
      _
    $region19: #{forward.1} parent=1 // pred_check_branch
      %30 = sbr.rel (0) target = $region21
    $region20: #{forward.1} parent=1 // pred_region
      _
    $region21: #{forward.1} parent=1 // pred_fallthru
      _
    // Predicated region
    $region22: #{forward.1} parent=1 // pred_check
      _
    $region23: #{forward.1} parent=1 // pred_check_branch
      %32 = sbr.rel (0) target = $region25
    $region24: #{forward.1} parent=1 // pred_region
      %33 = dma.done [#allocation3], 7168
    $region25: #{forward.1} parent=1 // pred_fallthru
      _
    %v35 = vld [vmem:[%s0] sm:$0xff]
    %v36 = vld [vmem:[%s0 + $0x8] sm:$0xff]
    %v37 = vld [vmem:[%s0 + $0x10] sm:$0xff]
    %v38 = vld [vmem:[%s0 + $0x18] sm:$0xff]
    %v39 = vld [vmem:[%s0 + $0x20] sm:$0xff]
    %v40 = vld [vmem:[%s0 + $0x28] sm:$0xff]
    %v41 = vld [vmem:[%s0 + $0x30] sm:$0xff]
    %v42 = vld [vmem:[%s0 + $0x38] sm:$0xff]
    %v43 = vld [vmem:[%s0 + $0x40] sm:$0xff]
    %v44 = vld [vmem:[%s0 + $0x48] sm:$0xff]
    %v45 = vld [vmem:[%s0 + $0x50] sm:$0xff]
    %v46 = vld [vmem:[%s0 + $0x58] sm:$0xff]
    %v47 = vld [vmem:[%s0 + $0x60] sm:$0xff]
    %v48 = vld [vmem:[%s0 + $0x68] sm:$0xff]
    %v49 = vld [vmem:[#allocation2] sm:$0xf]
    %v50 = vld [vmem:[#allocation2 + $0x4] sm:$0xf]
    %v51 = vld [vmem:[#allocation2 + $0x8] sm:$0xf]
    %v52 = vld [vmem:[#allocation2 + $0xc] sm:$0xf]
    %v53 = vld [vmem:[#allocation2 + $0x10] sm:$0xf]
    %v54 = vld [vmem:[#allocation2 + $0x14] sm:$0xf]
    %v55 = vld [vmem:[#allocation2 + $0x18] sm:$0xf]
    %v56 = vld [vmem:[#allocation2 + $0x1c] sm:$0xf]
    %v57 = vld [vmem:[#allocation2 + $0x20] sm:$0xf]
    %v58 = vld [vmem:[#allocation2 + $0x24] sm:$0xf]
    %v59 = vld [vmem:[#allocation2 + $0x28] sm:$0xf]
    %v60 = vld [vmem:[#allocation2 + $0x2c] sm:$0xf]
    %v61 = vld [vmem:[#allocation2 + $0x30] sm:$0xf]
    %v62 = vld [vmem:[#allocation2 + $0x34] sm:$0xf]
    %v63 = vld [vmem:[#allocation2 + $0x38] sm:$0xf]
    %v64 = vld [vmem:[#allocation2 + $0x3c] sm:$0xf]
    %v65 = vld [vmem:[#allocation2 + $0x40] sm:$0xf]
    %v66 = vld [vmem:[#allocation2 + $0x44] sm:$0xf]
    %v67 = vld [vmem:[#allocation2 + $0x48] sm:$0xf]
    %v68 = vld [vmem:[#allocation2 + $0x4c] sm:$0xf]
    %v69 = vld [vmem:[#allocation2 + $0x50] sm:$0xf]
    %v70 = vld [vmem:[#allocation2 + $0x54] sm:$0xf]
    %v71 = vld [vmem:[#allocation2 + $0x58] sm:$0xf]
    %v72 = vld [vmem:[#allocation2 + $0x5c] sm:$0xf]
    %v73 = vld [vmem:[#allocation2 + $0x60] sm:$0xf]
    %v74 = vld [vmem:[#allocation2 + $0x64] sm:$0xf]
    %v75 = vld [vmem:[#allocation2 + $0x68] sm:$0xf]
    %v76 = vld [vmem:[#allocation2 + $0x6c] sm:$0xf]
    %v77 = vld [vmem:[#allocation2 + $0x70] sm:$0xf]
    %v78 = vld [vmem:[#allocation2 + $0x74] sm:$0xf]
    %v79 = vld [vmem:[#allocation2 + $0x78] sm:$0xf]
    %v80 = vld [vmem:[#allocation2 + $0x7c] sm:$0xf]
    %v81 = vld [vmem:[#allocation2 + $0x80] sm:$0xf]
    %v82 = vld [vmem:[#allocation2 + $0x84] sm:$0xf]
    %v83 = vld [vmem:[#allocation2 + $0x88] sm:$0xf]
    %v84 = vld [vmem:[#allocation2 + $0x8c] sm:$0xf]
    %v85 = vld [vmem:[#allocation2 + $0x90] sm:$0xf]
    %v86 = vld [vmem:[#allocation2 + $0x94] sm:$0xf]
    %v87 = vld [vmem:[#allocation2 + $0x98] sm:$0xf]
    %v88 = vld [vmem:[#allocation2 + $0x9c] sm:$0xf]
    %v89 = vld [vmem:[#allocation2 + $0xa0] sm:$0xf]
    %v90 = vld [vmem:[#allocation2 + $0xa4] sm:$0xf]
    %v91 = vld [vmem:[#allocation2 + $0xa8] sm:$0xf]
    %v92 = vld [vmem:[#allocation2 + $0xac] sm:$0xf]
    %v93 = vld [vmem:[#allocation2 + $0xb0] sm:$0xf]
    %v94 = vld [vmem:[#allocation2 + $0xb4] sm:$0xf]
    %v95 = vld [vmem:[#allocation2 + $0xb8] sm:$0xf]
    %v96 = vld [vmem:[#allocation2 + $0xbc] sm:$0xf]
    %v97 = vld [vmem:[#allocation2 + $0xc0] sm:$0xf]
    %v98 = vld [vmem:[#allocation2 + $0xc4] sm:$0xf]
    %v99 = vld [vmem:[#allocation2 + $0xc8] sm:$0xf]
    %v100 = vld [vmem:[#allocation2 + $0xcc] sm:$0xf]
    %v101 = vld [vmem:[#allocation2 + $0xd0] sm:$0xf]
    %v102 = vld [vmem:[#allocation2 + $0xd4] sm:$0xf]
    %v103 = vld [vmem:[#allocation2 + $0xd8] sm:$0xf]
    %v104 = vld [vmem:[#allocation2 + $0xdc] sm:$0xf]
    %v105 = vld [vmem:[#allocation2 + $0xe0] sm:$0xf]
    %v106 = vld [vmem:[#allocation2 + $0xe4] sm:$0xf]
    %v107 = vld [vmem:[#allocation2 + $0xe8] sm:$0xf]
    %v108 = vld [vmem:[#allocation2 + $0xec] sm:$0xf]
    %v109 = vld [vmem:[#allocation2 + $0xf0] sm:$0xf]
    %v110 = vld [vmem:[#allocation2 + $0xf4] sm:$0xf]
    %v111 = vld [vmem:[#allocation2 + $0xf8] sm:$0xf]
    %v112 = vld [vmem:[#allocation2 + $0xfc] sm:$0xf]
    %v113 = vld [vmem:[#allocation2 + $0x100] sm:$0xf]
    %v114 = vld [vmem:[#allocation2 + $0x104] sm:$0xf]
    %v115 = vld [vmem:[#allocation2 + $0x108] sm:$0xf]
    %v116 = vld [vmem:[#allocation2 + $0x10c] sm:$0xf]
    %v117 = vld [vmem:[#allocation2 + $0x110] sm:$0xf]
    %v118 = vld [vmem:[#allocation2 + $0x114] sm:$0xf]
    %v119 = vld [vmem:[#allocation2 + $0x118] sm:$0xf]
    %v120 = vld [vmem:[#allocation2 + $0x11c] sm:$0xf]
    %v121 = vld [vmem:[#allocation2 + $0x120] sm:$0xf]
    %v122 = vld [vmem:[#allocation2 + $0x124] sm:$0xf]
    %v123 = vld [vmem:[#allocation2 + $0x128] sm:$0xf]
    %v124 = vld [vmem:[#allocation2 + $0x12c] sm:$0xf]
    %v125 = vld [vmem:[#allocation2 + $0x130] sm:$0xf]
    %v126 = vld [vmem:[#allocation2 + $0x134] sm:$0xf]
    %v127 = vld [vmem:[#allocation2 + $0x138] sm:$0xf]
    %v128 = vld [vmem:[#allocation2 + $0x13c] sm:$0xf]
    %v129 = vld [vmem:[#allocation2 + $0x140] sm:$0xf]
    %v130 = vld [vmem:[#allocation2 + $0x144] sm:$0xf]
    %v131 = vld [vmem:[#allocation2 + $0x148] sm:$0xf]
    %v132 = vld [vmem:[#allocation2 + $0x14c] sm:$0xf]
    %v133 = vld [vmem:[#allocation2 + $0x150] sm:$0xf]
    %v134 = vld [vmem:[#allocation2 + $0x154] sm:$0xf]
    %v135 = vld [vmem:[#allocation2 + $0x158] sm:$0xf]
    %v136 = vld [vmem:[#allocation2 + $0x15c] sm:$0xf]
    %v137 = vld [vmem:[#allocation2 + $0x160] sm:$0xf]
    %v138 = vld [vmem:[#allocation2 + $0x164] sm:$0xf]
    %v139 = vld [vmem:[#allocation2 + $0x168] sm:$0xf]
    %v140 = vld [vmem:[#allocation2 + $0x16c] sm:$0xf]
    %v141 = vld [vmem:[#allocation2 + $0x170] sm:$0xf]
    %v142 = vld [vmem:[#allocation2 + $0x174] sm:$0xf]
    %v143 = vld [vmem:[#allocation2 + $0x178] sm:$0xf]
    %v144 = vld [vmem:[#allocation2 + $0x17c] sm:$0xf]
    %v145 = vld [vmem:[#allocation2 + $0x180] sm:$0xf]
    %v146 = vld [vmem:[#allocation2 + $0x184] sm:$0xf]
    %v147 = vld [vmem:[#allocation2 + $0x188] sm:$0xf]
    %v148 = vld [vmem:[#allocation2 + $0x18c] sm:$0xf]
    %v149 = vld [vmem:[#allocation2 + $0x190] sm:$0xf]
    %v150 = vld [vmem:[#allocation2 + $0x194] sm:$0xf]
    %v151 = vld [vmem:[#allocation2 + $0x198] sm:$0xf]
    %v152 = vld [vmem:[#allocation2 + $0x19c] sm:$0xf]
    %v153 = vld [vmem:[#allocation2 + $0x1a0] sm:$0xf]
    %v154 = vld [vmem:[#allocation2 + $0x1a4] sm:$0xf]
    %v155 = vld [vmem:[#allocation2 + $0x1a8] sm:$0xf]
    %v156 = vld [vmem:[#allocation2 + $0x1ac] sm:$0xf]
    %v157 = vld [vmem:[#allocation2 + $0x1b0] sm:$0xf]
    %v158 = vld [vmem:[#allocation2 + $0x1b4] sm:$0xf]
    %v159 = vld [vmem:[#allocation2 + $0x1b8] sm:$0xf]
    %v160 = vld [vmem:[#allocation2 + $0x1bc] sm:$0xf]
    %v161 = vld [vmem:[%s2] sm:$0x1]
    %v162 = vpack.c.bf16 %v42, %v35
    %v163 = vpack.c.bf16 %v43, %v36
    %v164 = vpack.c.bf16 %v44, %v37
    %v165 = vpack.c.bf16 %v45, %v38
    %v166 = vpack.c.bf16 %v46, %v39
    %v167 = vpack.c.bf16 %v47, %v40
    %v168 = vpack.c.bf16 %v48, %v41
    %v170 = vlaneseq
    %v171 = vshrl.u32 %v170, 7
    %v172 = vsub.s32 0, %v171
    %v173 = vrot.slane %v161, %v172
    %v287 = vunpack.c.l.b16 %v49
    %v288 = vunpack.c.l.b16 %v50
    %v289 = vunpack.c.l.b16 %v51
    %v290 = vunpack.c.l.b16 %v52
    %v291 = vunpack.c.l.b16 %v53
    %v292 = vunpack.c.l.b16 %v54
    %v293 = vunpack.c.l.b16 %v55
    %v294 = vunpack.c.l.b16 %v56
    %v295 = vunpack.c.l.b16 %v57
    %v296 = vunpack.c.l.b16 %v58
    %v297 = vunpack.c.l.b16 %v59
    %v298 = vunpack.c.l.b16 %v60
    %v299 = vunpack.c.l.b16 %v61
    %v300 = vunpack.c.l.b16 %v62
    %v301 = vunpack.c.l.b16 %v63
    %v302 = vunpack.c.l.b16 %v64
    %v303 = vunpack.c.l.b16 %v65
    %v304 = vunpack.c.l.b16 %v66
    %v305 = vunpack.c.l.b16 %v67
    %v306 = vunpack.c.l.b16 %v68
    %v307 = vunpack.c.l.b16 %v69
    %v308 = vunpack.c.l.b16 %v70
    %v309 = vunpack.c.l.b16 %v71
    %v310 = vunpack.c.l.b16 %v72
    %v311 = vunpack.c.l.b16 %v73
    %v312 = vunpack.c.l.b16 %v74
    %v313 = vunpack.c.l.b16 %v75
    %v314 = vunpack.c.l.b16 %v76
    %v315 = vunpack.c.l.b16 %v77
    %v316 = vunpack.c.l.b16 %v78
    %v317 = vunpack.c.l.b16 %v79
    %v318 = vunpack.c.l.b16 %v80
    %v319 = vunpack.c.l.b16 %v81
    %v320 = vunpack.c.l.b16 %v82
    %v321 = vunpack.c.l.b16 %v83
    %v322 = vunpack.c.l.b16 %v84
    %v323 = vunpack.c.l.b16 %v85
    %v324 = vunpack.c.l.b16 %v86
    %v325 = vunpack.c.l.b16 %v87
    %v326 = vunpack.c.l.b16 %v88
    %v327 = vunpack.c.l.b16 %v89
    %v328 = vunpack.c.l.b16 %v90
    %v329 = vunpack.c.l.b16 %v91
    %v330 = vunpack.c.l.b16 %v92
    %v331 = vunpack.c.l.b16 %v93
    %v332 = vunpack.c.l.b16 %v94
    %v333 = vunpack.c.l.b16 %v95
    %v334 = vunpack.c.l.b16 %v96
    %v335 = vunpack.c.l.b16 %v97
    %v336 = vunpack.c.l.b16 %v98
    %v337 = vunpack.c.l.b16 %v99
    %v338 = vunpack.c.l.b16 %v100
    %v339 = vunpack.c.l.b16 %v101
    %v340 = vunpack.c.l.b16 %v102
    %v341 = vunpack.c.l.b16 %v103
    %v342 = vunpack.c.l.b16 %v104
    %v343 = vunpack.c.l.b16 %v105
    %v344 = vunpack.c.l.b16 %v106
    %v345 = vunpack.c.l.b16 %v107
    %v346 = vunpack.c.l.b16 %v108
    %v347 = vunpack.c.l.b16 %v109
    %v348 = vunpack.c.l.b16 %v110
    %v349 = vunpack.c.l.b16 %v111
    %v350 = vunpack.c.l.b16 %v112
    %v351 = vunpack.c.l.b16 %v113
    %v352 = vunpack.c.l.b16 %v114
    %v353 = vunpack.c.l.b16 %v115
    %v354 = vunpack.c.l.b16 %v116
    %v355 = vunpack.c.l.b16 %v117
    %v356 = vunpack.c.l.b16 %v118
    %v357 = vunpack.c.l.b16 %v119
    %v358 = vunpack.c.l.b16 %v120
    %v359 = vunpack.c.l.b16 %v121
    %v360 = vunpack.c.l.b16 %v122
    %v361 = vunpack.c.l.b16 %v123
    %v362 = vunpack.c.l.b16 %v124
    %v363 = vunpack.c.l.b16 %v125
    %v364 = vunpack.c.l.b16 %v126
    %v365 = vunpack.c.l.b16 %v127
    %v366 = vunpack.c.l.b16 %v128
    %v367 = vunpack.c.l.b16 %v129
    %v368 = vunpack.c.l.b16 %v130
    %v369 = vunpack.c.l.b16 %v131
    %v370 = vunpack.c.l.b16 %v132
    %v371 = vunpack.c.l.b16 %v133
    %v372 = vunpack.c.l.b16 %v134
    %v373 = vunpack.c.l.b16 %v135
    %v374 = vunpack.c.l.b16 %v136
    %v375 = vunpack.c.l.b16 %v137
    %v376 = vunpack.c.l.b16 %v138
    %v377 = vunpack.c.l.b16 %v139
    %v378 = vunpack.c.l.b16 %v140
    %v379 = vunpack.c.l.b16 %v141
    %v380 = vunpack.c.l.b16 %v142
    %v381 = vunpack.c.l.b16 %v143
    %v382 = vunpack.c.l.b16 %v144
    %v383 = vunpack.c.l.b16 %v145
    %v384 = vunpack.c.l.b16 %v146
    %v385 = vunpack.c.l.b16 %v147
    %v386 = vunpack.c.l.b16 %v148
    %v387 = vunpack.c.l.b16 %v149
    %v388 = vunpack.c.l.b16 %v150
    %v389 = vunpack.c.l.b16 %v151
    %v390 = vunpack.c.l.b16 %v152
    %v391 = vunpack.c.l.b16 %v153
    %v392 = vunpack.c.l.b16 %v154
    %v393 = vunpack.c.l.b16 %v155
    %v394 = vunpack.c.l.b16 %v156
    %v395 = vunpack.c.l.b16 %v157
    %v396 = vunpack.c.l.b16 %v158
    %v397 = vunpack.c.l.b16 %v159
    %v398 = vunpack.c.l.b16 %v160
    %v399 = vpack.c.b16 %v288, %v287
    %v400 = vpack.c.b16 %v290, %v289
    %v401 = vpack.c.b16 %v292, %v291
    %v402 = vpack.c.b16 %v294, %v293
    %v403 = vpack.c.b16 %v296, %v295
    %v404 = vpack.c.b16 %v298, %v297
    %v405 = vpack.c.b16 %v300, %v299
    %v406 = vpack.c.b16 %v302, %v301
    %v407 = vpack.c.b16 %v304, %v303
    %v408 = vpack.c.b16 %v306, %v305
    %v409 = vpack.c.b16 %v308, %v307
    %v410 = vpack.c.b16 %v310, %v309
    %v411 = vpack.c.b16 %v312, %v311
    %v412 = vpack.c.b16 %v314, %v313
    %v413 = vpack.c.b16 %v316, %v315
    %v414 = vpack.c.b16 %v318, %v317
    %v415 = vpack.c.b16 %v320, %v319
    %v416 = vpack.c.b16 %v322, %v321
    %v417 = vpack.c.b16 %v324, %v323
    %v418 = vpack.c.b16 %v326, %v325
    %v419 = vpack.c.b16 %v328, %v327
    %v420 = vpack.c.b16 %v330, %v329
    %v421 = vpack.c.b16 %v332, %v331
    %v422 = vpack.c.b16 %v334, %v333
    %v423 = vpack.c.b16 %v336, %v335
    %v424 = vpack.c.b16 %v338, %v337
    %v425 = vpack.c.b16 %v340, %v339
    %v426 = vpack.c.b16 %v342, %v341
    %v427 = vpack.c.b16 %v344, %v343
    %v428 = vpack.c.b16 %v346, %v345
    %v429 = vpack.c.b16 %v348, %v347
    %v430 = vpack.c.b16 %v350, %v349
    %v431 = vpack.c.b16 %v352, %v351
    %v432 = vpack.c.b16 %v354, %v353
    %v433 = vpack.c.b16 %v356, %v355
    %v434 = vpack.c.b16 %v358, %v357
    %v435 = vpack.c.b16 %v360, %v359
    %v436 = vpack.c.b16 %v362, %v361
    %v437 = vpack.c.b16 %v364, %v363
    %v438 = vpack.c.b16 %v366, %v365
    %v439 = vpack.c.b16 %v368, %v367
    %v440 = vpack.c.b16 %v370, %v369
    %v441 = vpack.c.b16 %v372, %v371
    %v442 = vpack.c.b16 %v374, %v373
    %v443 = vpack.c.b16 %v376, %v375
    %v444 = vpack.c.b16 %v378, %v377
    %v445 = vpack.c.b16 %v380, %v379
    %v446 = vpack.c.b16 %v382, %v381
    %v447 = vpack.c.b16 %v384, %v383
    %v448 = vpack.c.b16 %v386, %v385
    %v449 = vpack.c.b16 %v388, %v387
    %v450 = vpack.c.b16 %v390, %v389
    %v451 = vpack.c.b16 %v392, %v391
    %v452 = vpack.c.b16 %v394, %v393
    %v453 = vpack.c.b16 %v396, %v395
    %v454 = vpack.c.b16 %v398, %v397
    %511 = vmatprep.subr.bf16.mxu0 0
    %512 = vmatpush1.bf16.msra.mxu0 %v399
    %513 = vmatprep.subr.bf16.mxu0 0
    %514 = vmatpush1.bf16.msra.mxu0 %v400
    %515 = vmatprep.subr.bf16.mxu0 0
    %516 = vmatpush1.bf16.msra.mxu0 %v401
    %517 = vmatprep.subr.bf16.mxu0 0
    %518 = vmatpush1.bf16.msra.mxu0 %v402
    %519 = vmatprep.subr.bf16.mxu0 0
    %520 = vmatpush1.bf16.msra.mxu0 %v403
    %521 = vmatprep.subr.bf16.mxu0 0
    %522 = vmatpush1.bf16.msra.mxu0 %v404
    %523 = vmatprep.subr.bf16.mxu0 0
    %524 = vmatpush1.bf16.msra.mxu0 %v405
    %525 = vmatprep.subr.bf16.mxu0 0
    %526 = vmatpush1.bf16.msra.mxu0 %v406
    %527 = vmatprep.subr.bf16.mxu0 0
    %528 = vmatpush1.bf16.msra.mxu0 %v407
    %529 = vmatprep.subr.bf16.mxu0 0
    %530 = vmatpush1.bf16.msra.mxu0 %v408
    %531 = vmatprep.subr.bf16.mxu0 0
    %532 = vmatpush1.bf16.msra.mxu0 %v409
    %533 = vmatprep.subr.bf16.mxu0 0
    %534 = vmatpush1.bf16.msra.mxu0 %v410
    %535 = vmatprep.subr.bf16.mxu0 0
    %536 = vmatpush1.bf16.msra.mxu0 %v411
    %537 = vmatprep.subr.bf16.mxu0 0
    %538 = vmatpush1.bf16.msra.mxu0 %v412
    %539 = vmatprep.subr.bf16.mxu0 0
    %540 = vmatpush1.bf16.msra.mxu0 %v413
    %541 = vmatprep.subr.bf16.mxu0 0
    %542 = vmatpush1.bf16.msra.mxu0 %v414
    %543 = vmatprep.mubr.bf16.mxu0 %v163
    %544 = vmatmul.mubr.bf16.gmra.mrb[0].mxu0 %v162
    %v545 = vpop.f32.mrb[0].mxu0
    %v546 = vadd.f32 %v173, %v545
    %v547 = vpop.f32.mrb[0].mxu0
    %v548 = vpop.f32.mrb[0].mxu0
    %v549 = vadd.f32 %v173, %v548
    %v550 = vpop.f32.mrb[0].mxu0
    %551 = vdwg.mxu0
    %552 = vmatprep.subr.bf16.mxu0 0
    %553 = vmatpush1.bf16.msra.mxu0 %v415
    %554 = vmatprep.subr.bf16.mxu0 0
    %555 = vmatpush1.bf16.msra.mxu0 %v416
    %556 = vmatprep.subr.bf16.mxu0 0
    %557 = vmatpush1.bf16.msra.mxu0 %v417
    %558 = vmatprep.subr.bf16.mxu0 0
    %559 = vmatpush1.bf16.msra.mxu0 %v418
    %560 = vmatprep.subr.bf16.mxu0 0
    %561 = vmatpush1.bf16.msra.mxu0 %v419
    %562 = vmatprep.subr.bf16.mxu0 0
    %563 = vmatpush1.bf16.msra.mxu0 %v420
    %564 = vmatprep.subr.bf16.mxu0 0
    %565 = vmatpush1.bf16.msra.mxu0 %v421
    %566 = vmatprep.subr.bf16.mxu0 0
    %567 = vmatpush1.bf16.msra.mxu0 %v422
    %568 = vmatprep.subr.bf16.mxu0 0
    %569 = vmatpush1.bf16.msra.mxu0 %v423
    %570 = vmatprep.subr.bf16.mxu0 0
    %571 = vmatpush1.bf16.msra.mxu0 %v424
    %572 = vmatprep.subr.bf16.mxu0 0
    %573 = vmatpush1.bf16.msra.mxu0 %v425
    %574 = vmatprep.subr.bf16.mxu0 0
    %575 = vmatpush1.bf16.msra.mxu0 %v426
    %576 = vmatprep.subr.bf16.mxu0 0
    %577 = vmatpush1.bf16.msra.mxu0 %v427
    %578 = vmatprep.subr.bf16.mxu0 0
    %579 = vmatpush1.bf16.msra.mxu0 %v428
    %580 = vmatprep.subr.bf16.mxu0 0
    %581 = vmatpush1.bf16.msra.mxu0 %v429
    %582 = vmatprep.subr.bf16.mxu0 0
    %583 = vmatpush1.bf16.msra.mxu0 %v430
    %584 = vmatprep.mubr.bf16.mxu0 %v165
    %585 = vmatmul.mubr.bf16.gmra.mrb[0].mxu0 %v164
    %v586 = vpop.f32.mrb[0].mxu0
    %v587 = vadd.f32 %v546, %v586
    %v588 = vpop.f32.mrb[0].mxu0
    %v589 = vpop.f32.mrb[0].mxu0
    %v590 = vadd.f32 %v549, %v589
    %v591 = vpop.f32.mrb[0].mxu0
    %592 = vdwg.mxu0
    %593 = vmatprep.subr.bf16.mxu0 0
    %594 = vmatpush1.bf16.msra.mxu0 %v431
    %595 = vmatprep.subr.bf16.mxu0 0
    %596 = vmatpush1.bf16.msra.mxu0 %v432
    %597 = vmatprep.subr.bf16.mxu0 0
    %598 = vmatpush1.bf16.msra.mxu0 %v433
    %599 = vmatprep.subr.bf16.mxu0 0
    %600 = vmatpush1.bf16.msra.mxu0 %v434
    %601 = vmatprep.subr.bf16.mxu0 0
    %602 = vmatpush1.bf16.msra.mxu0 %v435
    %603 = vmatprep.subr.bf16.mxu0 0
    %604 = vmatpush1.bf16.msra.mxu0 %v436
    %605 = vmatprep.subr.bf16.mxu0 0
    %606 = vmatpush1.bf16.msra.mxu0 %v437
    %607 = vmatprep.subr.bf16.mxu0 0
    %608 = vmatpush1.bf16.msra.mxu0 %v438
    %609 = vmatprep.subr.bf16.mxu0 0
    %610 = vmatpush1.bf16.msra.mxu0 %v439
    %611 = vmatprep.subr.bf16.mxu0 0
    %612 = vmatpush1.bf16.msra.mxu0 %v440
    %613 = vmatprep.subr.bf16.mxu0 0
    %614 = vmatpush1.bf16.msra.mxu0 %v441
    %615 = vmatprep.subr.bf16.mxu0 0
    %616 = vmatpush1.bf16.msra.mxu0 %v442
    %617 = vmatprep.subr.bf16.mxu0 0
    %618 = vmatpush1.bf16.msra.mxu0 %v443
    %619 = vmatprep.subr.bf16.mxu0 0
    %620 = vmatpush1.bf16.msra.mxu0 %v444
    %621 = vmatprep.subr.bf16.mxu0 0
    %622 = vmatpush1.bf16.msra.mxu0 %v445
    %623 = vmatprep.subr.bf16.mxu0 0
    %624 = vmatpush1.bf16.msra.mxu0 %v446
    %625 = vmatprep.mubr.bf16.mxu0 %v167
    %626 = vmatmul.mubr.bf16.gmra.mrb[0].mxu0 %v166
    %v627 = vpop.f32.mrb[0].mxu0
    %v628 = vadd.f32 %v587, %v627
    %v629 = vpop.f32.mrb[0].mxu0
    %v630 = vpop.f32.mrb[0].mxu0
    %v631 = vadd.f32 %v590, %v630
    %v632 = vpop.f32.mrb[0].mxu0
    %633 = vdwg.mxu0
    %634 = vmatprep.subr.bf16.mxu0 0
    %635 = vmatpush1.bf16.msra.mxu0 %v447
    %636 = vmatprep.subr.bf16.mxu0 0
    %637 = vmatpush1.bf16.msra.mxu0 %v448
    %638 = vmatprep.subr.bf16.mxu0 0
    %639 = vmatpush1.bf16.msra.mxu0 %v449
    %640 = vmatprep.subr.bf16.mxu0 0
    %641 = vmatpush1.bf16.msra.mxu0 %v450
    %642 = vmatprep.subr.bf16.mxu0 0
    %643 = vmatpush1.bf16.msra.mxu0 %v451
    %644 = vmatprep.subr.bf16.mxu0 0
    %645 = vmatpush1.bf16.msra.mxu0 %v452
    %646 = vmatprep.subr.bf16.mxu0 0
    %647 = vmatpush1.bf16.msra.mxu0 %v453
    %648 = vmatprep.subr.bf16.mxu0 0
    %649 = vmatpush1.bf16.msra.mxu0 %v454
    %650 = vmatprep.subr.bf16.mxu0 0
    %651 = vmatpush1.bf16.msra.mxu0 0
    %652 = vmatprep.subr.bf16.mxu0 0
    %653 = vmatpush1.bf16.msra.mxu0 0
    %654 = vmatprep.subr.bf16.mxu0 0
    %655 = vmatpush1.bf16.msra.mxu0 0
    %656 = vmatprep.subr.bf16.mxu0 0
    %657 = vmatpush1.bf16.msra.mxu0 0
    %658 = vmatprep.subr.bf16.mxu0 0
    %659 = vmatpush1.bf16.msra.mxu0 0
    %660 = vmatprep.subr.bf16.mxu0 0
    %661 = vmatpush1.bf16.msra.mxu0 0
    %662 = vmatprep.subr.bf16.mxu0 0
    %663 = vmatpush1.bf16.msra.mxu0 0
    %664 = vmatprep.subr.bf16.mxu0 0
    %665 = vmatpush1.bf16.msra.mxu0 0
    %666 = vmatprep.mubr.bf16.mxu0 0
    %667 = vmatmul.mubr.bf16.gmra.mrb[0].mxu0 %v168
    %v668 = vpop.f32.mrb[0].mxu0
    %v669 = vadd.f32 %v628, %v668
    %v670 = vpop.f32.mrb[0].mxu0
    %v671 = vpop.f32.mrb[0].mxu0
    %v672 = vadd.f32 %v631, %v671
    %v673 = vpop.f32.mrb[0].mxu0
    %674 = vdwg.mxu0
    %v675 = vxor.u32 %v669, 2147483648
    %v676 = vxor.u32 %v672, 2147483648
    %v677 = vmul.f32 %v675, 1.442695
    %v678 = vpow.pop %v677
    %v679 = vmul.f32 %v676, 1.442695
    %v680 = vpow.pop %v679
    %v681 = vadd.f32 %v678, 1.0
    %v682 = vadd.f32 %v680, 1.0
    %v683 = vrcp.pop %v681
    %v684 = vmul.f32 1.0, %v683
    %v685 = vrcp.pop %v682
    %v686 = vmul.f32 1.0, %v685
    %v687 = vld [vmem:[%s3] sm:$0xf]
    %v688 = vld [vmem:[%s3 + $0x4] sm:$0xf]
    %v689 = vld [vmem:[%s3 + $0x8] sm:$0xf]
    %v690 = vld [vmem:[%s3 + $0xc] sm:$0xf]
    %v691 = vld [vmem:[%s3 + $0x10] sm:$0xf]
    %v692 = vld [vmem:[%s3 + $0x14] sm:$0xf]
    %v693 = vld [vmem:[%s3 + $0x18] sm:$0xf]
    %v694 = vld [vmem:[%s3 + $0x1c] sm:$0xf]
    %v695 = vld [vmem:[%s3 + $0x20] sm:$0xf]
    %v696 = vld [vmem:[%s3 + $0x24] sm:$0xf]
    %v697 = vld [vmem:[%s3 + $0x28] sm:$0xf]
    %v698 = vld [vmem:[%s3 + $0x2c] sm:$0xf]
    %v699 = vld [vmem:[%s3 + $0x30] sm:$0xf]
    %v700 = vld [vmem:[%s3 + $0x34] sm:$0xf]
    %v701 = vld [vmem:[%s3 + $0x38] sm:$0xf]
    %v702 = vld [vmem:[%s3 + $0x3c] sm:$0xf]
    %v703 = vld [vmem:[%s4] sm:$0x1]
    %v704 = vpack.c.bf16 %v686, %v684
    %v706 = vlaneseq
    %v707 = vshrl.u32 %v706, 7
    %v708 = vsub.s32 0, %v707
    %v709 = vrot.slane %v703, %v708
    %v727 = vunpack.c.l.b16 %v687
    %v728 = vunpack.c.l.b16 %v688
    %v729 = vunpack.c.l.b16 %v689
    %v730 = vunpack.c.l.b16 %v690
    %v731 = vunpack.c.l.b16 %v691
    %v732 = vunpack.c.l.b16 %v692
    %v733 = vunpack.c.l.b16 %v693
    %v734 = vunpack.c.l.b16 %v694
    %v735 = vunpack.c.l.b16 %v695
    %v736 = vunpack.c.l.b16 %v696
    %v737 = vunpack.c.l.b16 %v697
    %v738 = vunpack.c.l.b16 %v698
    %v739 = vunpack.c.l.b16 %v699
    %v740 = vunpack.c.l.b16 %v700
    %v741 = vunpack.c.l.b16 %v701
    %v742 = vunpack.c.l.b16 %v702
    %v743 = vpack.c.b16 %v728, %v727
    %v744 = vpack.c.b16 %v730, %v729
    %v745 = vpack.c.b16 %v732, %v731
    %v746 = vpack.c.b16 %v734, %v733
    %v747 = vpack.c.b16 %v736, %v735
    %v748 = vpack.c.b16 %v738, %v737
    %v749 = vpack.c.b16 %v740, %v739
    %v750 = vpack.c.b16 %v742, %v741
    %759 = vmatprep.subr.bf16.mxu0 0
    %760 = vmatpush1.bf16.msra.mxu0 %v743
    %761 = vmatprep.subr.bf16.mxu0 0
    %762 = vmatpush1.bf16.msra.mxu0 %v744
    %763 = vmatprep.subr.bf16.mxu0 0
    %764 = vmatpush1.bf16.msra.mxu0 %v745
    %765 = vmatprep.subr.bf16.mxu0 0
    %766 = vmatpush1.bf16.msra.mxu0 %v746
    %767 = vmatprep.subr.bf16.mxu0 0
    %768 = vmatpush1.bf16.msra.mxu0 %v747
    %769 = vmatprep.subr.bf16.mxu0 0
    %770 = vmatpush1.bf16.msra.mxu0 %v748
    %771 = vmatprep.subr.bf16.mxu0 0
    %772 = vmatpush1.bf16.msra.mxu0 %v749
    %773 = vmatprep.subr.bf16.mxu0 0
    %774 = vmatpush1.bf16.msra.mxu0 %v750
    %775 = vmatprep.subr.bf16.mxu0 0
    %776 = vmatpush1.bf16.msra.mxu0 0
    %777 = vmatprep.subr.bf16.mxu0 0
    %778 = vmatpush1.bf16.msra.mxu0 0
    %779 = vmatprep.subr.bf16.mxu0 0
    %780 = vmatpush1.bf16.msra.mxu0 0
    %781 = vmatprep.subr.bf16.mxu0 0
    %782 = vmatpush1.bf16.msra.mxu0 0
    %783 = vmatprep.subr.bf16.mxu0 0
    %784 = vmatpush1.bf16.msra.mxu0 0
    %785 = vmatprep.subr.bf16.mxu0 0
    %786 = vmatpush1.bf16.msra.mxu0 0
    %787 = vmatprep.subr.bf16.mxu0 0
    %788 = vmatpush1.bf16.msra.mxu0 0
    %789 = vmatprep.subr.bf16.mxu0 0
    %790 = vmatpush1.bf16.msra.mxu0 0
    %791 = vmatprep.mubr.bf16.mxu0 0
    %792 = vmatmul.mubr.bf16.gmra.mrb[0].mxu0 %v704
    %v793 = vpop.f32.mrb[0].mxu0
    %v794 = vadd.f32 %v709, %v793
    %v795 = vpop.f32.mrb[0].mxu0
    %v796 = vpop.f32.mrb[0].mxu0
    %v797 = vadd.f32 %v709, %v796
    %v798 = vpop.f32.mrb[0].mxu0
    %799 = vdwg.mxu0
    %v800 = vxor.u32 %v794, 2147483648
    %v801 = vxor.u32 %v797, 2147483648
    %v802 = vmul.f32 %v800, 1.442695
    %v803 = vpow.pop %v802
    %v804 = vmul.f32 %v801, 1.442695
    %v805 = vpow.pop %v804
    %v806 = vadd.f32 %v803, 1.0
    %v807 = vadd.f32 %v805, 1.0
    %v808 = vrcp.pop %v806
    %v809 = vmul.f32 1.0, %v808
    %v810 = vrcp.pop %v807
    %v811 = vmul.f32 1.0, %v810
    %812 = vst [vmem:[%s5] sm:$0xff] %v809
    %813 = vst [vmem:[%s5 + $0x8] sm:$0xff] %v811
    // Predicated region
    $region26: #{forward.1} parent=1 // pred_check
      _
    $region27: #{forward.1} parent=1 // pred_check_branch
      %815 = sbr.rel (0) target = $region29
    $region28: #{forward.1} parent=1 // pred_region
      _
    $region29: #{forward.1} parent=1 // pred_fallthru
      _
    // Predicated region
    $region30: #{forward.1} parent=1 // pred_check
      _
    $region31: #{forward.1} parent=1 // pred_check_branch
      %817 = sbr.rel (0) target = $region33
    $region32: #{forward.1} parent=1 // pred_region
      _
    $region33: #{forward.1} parent=1 // pred_fallthru
      _
    %818 = vsyncpa [#allocation3], 1

</llo_original>
